<compile_context>
chip_gen: v5e
topology: v5e:2x2
jax: 0.10.0
libtpu: 0.0.40
codegen_flags: <defaults>
</compile_context>

<pallas_src>
import functools
import math

import jax
import jax.numpy as jnp
from jax import lax
from jax.experimental import pallas as pl
from jax.experimental.pallas import tpu as pltpu


def _causal_conv1d_kernel(x_ref, w_ref, b_ref, o_ref, prev_ref):
    # x_ref:    (1, F, Tt)  current time-tile, channels on sublanes, time on lanes
    # w_ref:    (K, F, 1)   depthwise taps (tap, channel, 1)
    # b_ref:    (F, 1)      bias
    # o_ref:    (1, F, Tt)  output tile
    # prev_ref: (F, Tt)     VMEM carry: previous time-tile (causal halo)
    j = pl.program_id(1)

    x = x_ref[0]                                   # (F, Tt), f32
    f_dim, tile_t = x.shape
    k_size = w_ref.shape[0]

    # New batch row / start of sequence: causal left-padding is zeros.
    @pl.when(j == 0)
    def _():
        prev_ref[...] = jnp.zeros_like(prev_ref)

    prev = prev_ref[...]                           # (F, Tt)
    lane = lax.broadcasted_iota(jnp.int32, (f_dim, tile_t), 1)

    acc = jnp.zeros((f_dim, tile_t), jnp.float32)
    for k in range(k_size):
        s = k_size - 1 - k                         # causal shift for this tap
        if s == 0:
            xs = x
        else:
            # Want xs[:, t] = x[:, t - s] for t >= s, prev[:, Tt + t - s] for t < s.
            # Splice prev's tail into the columns that will wrap, then rotate right
            # by s on the lane axis (XLU roll, no VMEM copy).
            merged = jnp.where(lane < tile_t - s, x, prev)
            xs = pltpu.roll(merged, shift=s, axis=1)
        acc = acc + w_ref[k] * xs                  # (F,1) broadcast over lanes
    acc = acc + b_ref[...]                         # bias, (F,1) broadcast

    o_ref[0] = acc.astype(o_ref.dtype)             # lane-dense store
    prev_ref[...] = x                              # carry for the next time-tile


def _pick_tile(t_pad, max_tile):
    """Largest multiple of 128 that divides t_pad and is <= max_tile."""
    best = 128
    t = 128
    while t <= min(t_pad, max_tile):
        if t_pad % t == 0:
            best = t
        t += 128
    return best


@functools.partial(jax.jit, static_argnames=("max_tile",))
def causal_conv1d(x, weight, bias, *, max_tile=512):
    """Causal depthwise conv1d.

    x:      (B, T, F) float input
    weight: (F, 1, K) depthwise conv weight (PyTorch Conv1d layout, groups=F)
    bias:   (F,)      conv bias
    returns (B, T, F) float32
    """
    b_dim, t_dim, f_dim = x.shape
    k_size = weight.shape[-1]

    # (B, T, F) -> (B, F, T): put time on the 128-lane axis.
    x_ft = jnp.transpose(x, (0, 2, 1)).astype(jnp.float32)

    # Right-pad time to a multiple of 128 (padding never feeds outputs we keep).
    t_pad = ((t_dim + 127) // 128) * 128
    if t_pad != t_dim:
        x_ft = jnp.pad(x_ft, ((0, 0), (0, 0), (0, t_pad - t_dim)))

    tile_t = _pick_tile(t_pad, max_tile)
    assert k_size - 1 < tile_t, "kernel_size must be smaller than the time tile"

    # Pre-transpose weights in the wrapper (no in-kernel transposes):
    # (F, 1, K) -> (K, F, 1); bias -> (F, 1).
    w = jnp.transpose(weight.reshape(f_dim, k_size), (1, 0))
    w = w.reshape(k_size, f_dim, 1).astype(jnp.float32)
    b = bias.reshape(f_dim, 1).astype(jnp.float32)

    grid = (b_dim, t_pad // tile_t)
    out_ft = pl.pallas_call(
        _causal_conv1d_kernel,
        out_shape=jax.ShapeDtypeStruct((b_dim, f_dim, t_pad), jnp.float32),
        grid=grid,
        in_specs=[
            pl.BlockSpec((1, f_dim, tile_t), lambda bb, j: (bb, 0, j)),
            pl.BlockSpec((k_size, f_dim, 1), lambda bb, j: (0, 0, 0)),
            pl.BlockSpec((f_dim, 1), lambda bb, j: (0, 0)),
        ],
        out_specs=pl.BlockSpec((1, f_dim, tile_t), lambda bb, j: (bb, 0, j)),
        scratch_shapes=[pltpu.VMEM((f_dim, tile_t), jnp.float32)],
        compiler_params=pltpu.CompilerParams(
            dimension_semantics=("parallel", "arbitrary")),
    )(x_ft, w, b)

    out_ft = out_ft[:, :, :t_dim]
    return jnp.transpose(out_ft, (0, 2, 1))


def causal_conv1d_ref(x, weight, bias):
    """Pure-JAX reference (same semantics as the PyTorch module)."""
    b_dim, t_dim, f_dim = x.shape
    k_size = weight.shape[-1]
    w = weight.reshape(f_dim, k_size)
    xp = jnp.pad(x.astype(jnp.float32), ((0, 0), (k_size - 1, 0), (0, 0)))
    out = jnp.zeros((b_dim, t_dim, f_dim), jnp.float32)
    for k in range(k_size):
        out = out + xp[:, k:k + t_dim, :] * w[:, k][None, None, :]
    return out + bias[None, None, :].astype(jnp.float32)


if __name__ == "__main__":
    key = jax.random.PRNGKey(0)
    kx, kw, kb = jax.random.split(key, 3)

    B, T, F, K = 2, 256, 4, 4                      # (batch, time, feature), kernel_size=4
    x = jax.random.normal(kx, (B, T, F), dtype=jnp.float32)

    # nn.Conv1d(dim, dim, K, groups=dim) init: U(-1/sqrt(K), 1/sqrt(K)) for weight & bias.
    bound = 1.0 / math.sqrt(K)
    weight = jax.random.uniform(kw, (F, 1, K), minval=-bound, maxval=bound,
                                dtype=jnp.float32)
    bias = jax.random.uniform(kb, (F,), minval=-bound, maxval=bound,
                              dtype=jnp.float32)

    ref = causal_conv1d_ref(x, weight, bias)

    # Multi-tile path (exercises the cross-tile causal carry).
    out = causal_conv1d(x, weight, bias, max_tile=128)
    out = jax.block_until_ready(out)
    assert out.shape == (B, T, F), out.shape
    assert bool(jnp.all(jnp.isfinite(out)))
    assert float(jnp.max(jnp.abs(out - ref))) < 1e-5

    # Default (single wide tile) path.
    out2 = causal_conv1d(x, weight, bias)
    out2 = jax.block_until_ready(out2)
    assert float(jnp.max(jnp.abs(out2 - ref))) < 1e-5

    print("KERNEL_OK")
</pallas_src>

<mosaic_0001>
module attributes {stable_mosaic.version = 11 : i64} {
  func.func @_causal_conv1d_kernel(%arg0: i32, %arg1: i32, %arg2: memref<1x4x128xf32, #tpu.memory_space<vmem>>, %arg3: memref<4x4x1xf32, #tpu.memory_space<vmem>>, %arg4: memref<4x1xf32, #tpu.memory_space<vmem>>, %arg5: memref<1x4x128xf32, #tpu.memory_space<vmem>>, %arg6: memref<4x128xf32, #tpu.memory_space<vmem>>) attributes {dimension_semantics = [#tpu.dimension_semantics<parallel>, #tpu.dimension_semantics<arbitrary>], iteration_bounds = array<i64: 2, 2>, scalar_prefetch = 0 : i64, scratch_operands = 1 : i64, tpu.core_type = #tpu.core_type<tc>, window_params = [{transform_indices = @transform_0, window_bounds = array<i64: 1, 4, 128>}, {pipeline_mode = #tpu.pipeline_mode<synchronous>, transform_indices = @transform_1, window_bounds = array<i64: 4, 4, 1>}, {pipeline_mode = #tpu.pipeline_mode<synchronous>, transform_indices = @transform_2, window_bounds = array<i64: 4, 1>}, {transform_indices = @transform_3, window_bounds = array<i64: 1, 4, 128>}]} {
    %c0 = arith.constant 0 : index
    %c0_0 = arith.constant 0 : index
    %c0_1 = arith.constant 0 : index
    %0 = vector.load %arg2[%c0, %c0_0, %c0_1] : memref<1x4x128xf32, #tpu.memory_space<vmem>>, vector<1x4x128xf32>
    %1 = vector.shape_cast %0 : vector<1x4x128xf32> to vector<4x128xf32>
    %c0_i32 = arith.constant 0 : i32
    %2 = arith.cmpi eq, %arg1, %c0_i32 : i32
    %3 = arith.extui %2 : i1 to i32
    %c0_i32_2 = arith.constant 0 : i32
    %4 = arith.cmpi ne, %3, %c0_i32_2 : i32
    scf.if %4 {
      %cst_21 = arith.constant 0.000000e+00 : f32
      %47 = vector.broadcast %cst_21 : f32 to vector<4x128xf32>
      %c0_22 = arith.constant 0 : index
      %c0_23 = arith.constant 0 : index
      %48 = vector.load %arg6[%c0_22, %c0_23] : memref<4x128xf32, #tpu.memory_space<vmem>>, vector<4x128xf32>
      tpu.vector_store %arg6[%c0_22, %c0_23], %47 {strides = array<i32>} : memref<4x128xf32, #tpu.memory_space<vmem>>, vector<4x128xf32>,
    } else {
    }
    %c0_3 = arith.constant 0 : index
    %c0_4 = arith.constant 0 : index
    %5 = vector.load %arg6[%c0_3, %c0_4] : memref<4x128xf32, #tpu.memory_space<vmem>>, vector<4x128xf32>
    %6 = tpu.iota {dimensions = array<i32: 1>} : vector<4x128xi32>
    %cst = arith.constant 0.000000e+00 : f32
    %7 = vector.broadcast %cst : f32 to vector<4x128xf32>
    %c125_i32 = arith.constant 125 : i32
    %8 = vector.broadcast %c125_i32 : i32 to vector<4x128xi32>
    %9 = arith.cmpi slt, %6, %8 : vector<4x128xi32>
    %10 = arith.select %9, %1, %5 : vector<4x128xi1>, vector<4x128xf32>
    %c3_i32 = arith.constant 3 : i32
    %11 = tpu.dynamic_rotate %10 by %c3_i32 dim 1 : vector<4x128xf32>, i32 -> vector<4x128xf32>
    %c0_5 = arith.constant 0 : index
    %c0_6 = arith.constant 0 : index
    %c0_7 = arith.constant 0 : index
    %12 = vector.load %arg3[%c0_5, %c0_6, %c0_7] : memref<4x4x1xf32, #tpu.memory_space<vmem>>, vector<1x4x1xf32>
    %13 = vector.shape_cast %12 : vector<1x4x1xf32> to vector<4x1xf32>
    %14 = vector.broadcast %13 : vector<4x1xf32> to vector<4x128xf32>
    %15 = arith.mulf %14, %11 : vector<4x128xf32>
    %16 = arith.addf %7, %15 : vector<4x128xf32>
    %c126_i32 = arith.constant 126 : i32
    %17 = vector.broadcast %c126_i32 : i32 to vector<4x128xi32>
    %18 = arith.cmpi slt, %6, %17 : vector<4x128xi32>
    %19 = arith.select %18, %1, %5 : vector<4x128xi1>, vector<4x128xf32>
    %c2_i32 = arith.constant 2 : i32
    %20 = tpu.dynamic_rotate %19 by %c2_i32 dim 1 : vector<4x128xf32>, i32 -> vector<4x128xf32>
    %c1 = arith.constant 1 : index
    %c0_8 = arith.constant 0 : index
    %c0_9 = arith.constant 0 : index
    %21 = vector.load %arg3[%c1, %c0_8, %c0_9] : memref<4x4x1xf32, #tpu.memory_space<vmem>>, vector<1x4x1xf32>
    %22 = vector.shape_cast %21 : vector<1x4x1xf32> to vector<4x1xf32>
    %23 = vector.broadcast %22 : vector<4x1xf32> to vector<4x128xf32>
    %24 = arith.mulf %23, %20 : vector<4x128xf32>
    %25 = arith.addf %16, %24 : vector<4x128xf32>
    %c127_i32 = arith.constant 127 : i32
    %26 = vector.broadcast %c127_i32 : i32 to vector<4x128xi32>
    %27 = arith.cmpi slt, %6, %26 : vector<4x128xi32>
    %28 = arith.select %27, %1, %5 : vector<4x128xi1>, vector<4x128xf32>
    %c1_i32 = arith.constant 1 : i32
    %29 = tpu.dynamic_rotate %28 by %c1_i32 dim 1 : vector<4x128xf32>, i32 -> vector<4x128xf32>
    %c2 = arith.constant 2 : index
    %c0_10 = arith.constant 0 : index
    %c0_11 = arith.constant 0 : index
    %30 = vector.load %arg3[%c2, %c0_10, %c0_11] : memref<4x4x1xf32, #tpu.memory_space<vmem>>, vector<1x4x1xf32>
    %31 = vector.shape_cast %30 : vector<1x4x1xf32> to vector<4x1xf32>
    %32 = vector.broadcast %31 : vector<4x1xf32> to vector<4x128xf32>
    %33 = arith.mulf %32, %29 : vector<4x128xf32>
    %34 = arith.addf %25, %33 : vector<4x128xf32>
    %c3 = arith.constant 3 : index
    %c0_12 = arith.constant 0 : index
    %c0_13 = arith.constant 0 : index
    %35 = vector.load %arg3[%c3, %c0_12, %c0_13] : memref<4x4x1xf32, #tpu.memory_space<vmem>>, vector<1x4x1xf32>
    %36 = vector.shape_cast %35 : vector<1x4x1xf32> to vector<4x1xf32>
    %37 = vector.broadcast %36 : vector<4x1xf32> to vector<4x128xf32>
    %38 = arith.mulf %37, %1 : vector<4x128xf32>
    %39 = arith.addf %34, %38 : vector<4x128xf32>
    %c0_14 = arith.constant 0 : index
    %c0_15 = arith.constant 0 : index
    %40 = vector.load %arg4[%c0_14, %c0_15] : memref<4x1xf32, #tpu.memory_space<vmem>>, vector<4x1xf32>
    %41 = vector.broadcast %40 : vector<4x1xf32> to vector<4x128xf32>
    %42 = arith.addf %39, %41 : vector<4x128xf32>
    %c0_16 = arith.constant 0 : index
    %c0_17 = arith.constant 0 : index
    %c0_18 = arith.constant 0 : index
    %43 = vector.load %arg5[%c0_16, %c0_17, %c0_18] : memref<1x4x128xf32, #tpu.memory_space<vmem>>, vector<1x4x128xf32>
    %44 = vector.shape_cast %43 : vector<1x4x128xf32> to vector<4x128xf32>
    %45 = vector.shape_cast %42 : vector<4x128xf32> to vector<1x4x128xf32>
    tpu.vector_store %arg5[%c0_16, %c0_17, %c0_18], %45 {strides = array<i32>} : memref<1x4x128xf32, #tpu.memory_space<vmem>>, vector<1x4x128xf32>,
    %c0_19 = arith.constant 0 : index
    %c0_20 = arith.constant 0 : index
    %46 = vector.load %arg6[%c0_19, %c0_20] : memref<4x128xf32, #tpu.memory_space<vmem>>, vector<4x128xf32>
    tpu.vector_store %arg6[%c0_19, %c0_20], %1 {strides = array<i32>} : memref<4x128xf32, #tpu.memory_space<vmem>>, vector<4x128xf32>,
    return
  }
  func.func @transform_0(%arg0: i32, %arg1: i32) -> (i32, i32, i32) {
    %c0_i32 = arith.constant 0 : i32
    %c0_i32_0 = arith.constant 0 : i32
    return %arg0, %c0_i32, %arg1 : i32, i32, i32
  }
  func.func @transform_1(%arg0: i32, %arg1: i32) -> (i32, i32, i32) {
    %c0_i32 = arith.constant 0 : i32
    %c0_i32_0 = arith.constant 0 : i32
    %c0_i32_1 = arith.constant 0 : i32
    %c0_i32_2 = arith.constant 0 : i32
    return %c0_i32, %c0_i32_0, %c0_i32_1 : i32, i32, i32
  }
  func.func @transform_2(%arg0: i32, %arg1: i32) -> (i32, i32) {
    %c0_i32 = arith.constant 0 : i32
    %c0_i32_0 = arith.constant 0 : i32
    %c0_i32_1 = arith.constant 0 : i32
    return %c0_i32, %c0_i32_0 : i32, i32
  }
  func.func @transform_3(%arg0: i32, %arg1: i32) -> (i32, i32, i32) {
    %c0_i32 = arith.constant 0 : i32
    %c0_i32_0 = arith.constant 0 : i32
    return %arg0, %c0_i32, %arg1 : i32, i32, i32
  }
}

</mosaic_0001>

<llo_original>
// kernel: causal_conv1d.1
$region0: #{causal_conv1d.1}
  #allocation0 [shape = 'u32[]', space=smem, size = 0x4, offset = 0x4, fixed_abs, tag = 'smem constant byte address 0x4 - core index']
  #allocation1 [shape = 'u32[72,128]{1,0:T(1,128)}', space=vmem, size = 0x9000, scoped, tag = 'internal scratch']
  #allocation2 [shape = 'f32[4,128]{1,0:T(4,128)}', space=vmem, size = 0x800, scoped, tag = 'scratch operand']
  %s0 = inlined_call_operand.vmem [shape: f32[2,4,256], index: 0, kind: input, shape index: {}]
  %s1 = inlined_call_operand.vmem [shape: f32[4,4,1], index: 1, kind: input, shape index: {}]
  %s2 = inlined_call_operand.vmem [shape: f32[4,1], index: 2, kind: input, shape index: {}]
  %s3 = inlined_call_operand.hbm [shape: f32[2,4,256], index: 3, kind: output, shape index: {}]
  %s4 = sld [smem:[#allocation0]]
  $region49: #{causal_conv1d.1} parent=0
    _
  %s6 = ssub.s32 1, %s4
  %s7 = scalar_select 0, %s6, %s4
  $region1: #{causal_conv1d.1} parent=0
    #allocation3 [shape = 'u8[4096]{0}', space=vmem, size = 0x1000, scoped, tag = 'output window, operand 0']
    #allocation4 [shape = 's32[2]{0}', space=sflag, size = 0x8, scoped, tag = 'scoped memory for causal_conv1d.1']
    %8 = vsyncpa [#allocation4], 0
    %s9 = scalar_lea.sflag [#allocation4], 1
    %10 = vsyncpa %s9, 0
    loop: start=0, step=1, limit=6
    $region2: #{causal_conv1d.1} parent=1 // loop_pre_header
      _
    $region3: #{causal_conv1d.1} parent=1 // loop_header
      %s12 = sphi 0, %s16
      %p13 = scmp.ge.s32.totalorder %s12, 6
      %s19 = sphi 0, %s31
      %s20 = sphi 0, %s27
      %s21 = sphi 0, %s19
      %s22 = sphi 0, %s20
      %s23 = sphi 0, %s21
      %s24 = sphi 0, %s22
      %s36 = sphi 0, %s38
      %s39 = sphi 0, %s36
      %s40 = sphi 0, %s39
      %s56 = sphi 0, %s40
      %s60 = sphi 0, %s60
      %s62 = sphi 0, %s60
      %s63 = sphi 0, %s62
      %s77 = sphi 0, %s63
      %s81 = sphi 0, %s81
      %s83 = sphi 0, %s81
      %s84 = sphi 0, %s83
      %s98 = sphi 0, %s84
      %s106 = sphi 0, %s108
      %s109 = sphi 0, %s106
      %s110 = sphi 0, %s109
      %s126 = sphi 0, %s110
    $region4: #{causal_conv1d.1} parent=1 // loop_header_branch
      %15 = sbr.rel (%p13) target = $region8
    $region5: #{causal_conv1d.1} parent=1 // loop_body
      %s17 = ssub.s32 %s12, 1
      %s18 = ssub.s32 %s12, 2
      %s25 = sadd.s32 1, %s20
      %p26 = scmp.ge.s32.totalorder %s25, 2
      %s27 = scalar_select %p26, 0, %s25
      %s28 = sadd.s32 1, %s19
      %s29 = scalar_select %p26, %s28, %s19
      %p30 = scmp.ge.s32.totalorder %s29, 2
      %s31 = scalar_select %p30, 0, %s29
      %s32 = ssub.s32 %s19, %s31
      %s33 = ssub.s32 %s20, %s27
      %s34 = sor.u32 %s32, %s33
      %p35 = scmp.eq.s32.totalorder %s34, 0
      %s37 = sadd.s32 %s36, 1
      %s38 = scalar_select %p35, %s36, %s37
      %p41 = pneg %p35
      %p42 = scmp.eq.s32.totalorder %s12, 3
      %p43 = por %p41, %p42
      %p44 = scmp.ne.s32.totalorder %s36, %s39
      %p45 = scmp.eq.s32.totalorder %s12, 0
      %p46 = por %p44, %p45
      %p47 = scmp.ne.s32.totalorder %s36, %s39
      %p48 = scmp.eq.s32.totalorder %s17, 3
      %p49 = por %p47, %p48
      %p50 = scmp.ne.s32.totalorder %s39, %s40
      %p51 = scmp.eq.s32.totalorder %s17, 0
      %p52 = por %p50, %p51
      %p53 = scmp.ne.s32.totalorder %s39, %s40
      %p54 = scmp.eq.s32.totalorder %s18, 3
      %p55 = por %p53, %p54
      %p57 = scmp.ne.s32.totalorder %s40, %s56
      %p58 = scmp.eq.s32.totalorder %s18, 0
      %p59 = por %p57, %p58
      %s61 = sadd.s32 %s60, 1
      %p64 = scmp.eq.s32.totalorder %s12, 3
      %p65 = scmp.ne.s32.totalorder %s60, %s62
      %p66 = scmp.eq.s32.totalorder %s12, 0
      %p67 = por %p65, %p66
      %p68 = scmp.ne.s32.totalorder %s60, %s62
      %p69 = scmp.eq.s32.totalorder %s17, 3
      %p70 = por %p68, %p69
      %p71 = scmp.ne.s32.totalorder %s62, %s63
      %p72 = scmp.eq.s32.totalorder %s17, 0
      %p73 = por %p71, %p72
      %p74 = scmp.ne.s32.totalorder %s62, %s63
      %p75 = scmp.eq.s32.totalorder %s18, 3
      %p76 = por %p74, %p75
      %p78 = scmp.ne.s32.totalorder %s63, %s77
      %p79 = scmp.eq.s32.totalorder %s18, 0
      %p80 = por %p78, %p79
      %s82 = sadd.s32 %s81, 1
      %p85 = scmp.eq.s32.totalorder %s12, 3
      %p86 = scmp.ne.s32.totalorder %s81, %s83
      %p87 = scmp.eq.s32.totalorder %s12, 0
      %p88 = por %p86, %p87
      %p89 = scmp.ne.s32.totalorder %s81, %s83
      %p90 = scmp.eq.s32.totalorder %s17, 3
      %p91 = por %p89, %p90
      %p92 = scmp.ne.s32.totalorder %s83, %s84
      %p93 = scmp.eq.s32.totalorder %s17, 0
      %p94 = por %p92, %p93
      %p95 = scmp.ne.s32.totalorder %s83, %s84
      %p96 = scmp.eq.s32.totalorder %s18, 3
      %p97 = por %p95, %p96
      %p99 = scmp.ne.s32.totalorder %s84, %s98
      %p100 = scmp.eq.s32.totalorder %s18, 0
      %p101 = por %p99, %p100
      %s102 = ssub.s32 %s19, %s31
      %s103 = ssub.s32 %s20, %s27
      %s104 = sor.u32 %s102, %s103
      %p105 = scmp.eq.s32.totalorder %s104, 0
      %s107 = sadd.s32 %s106, 1
      %s108 = scalar_select %p105, %s106, %s107
      %p111 = pneg %p105
      %p112 = scmp.eq.s32.totalorder %s12, 3
      %p113 = por %p111, %p112
      %p114 = scmp.ne.s32.totalorder %s106, %s109
      %p115 = scmp.eq.s32.totalorder %s12, 0
      %p116 = por %p114, %p115
      %p117 = scmp.ne.s32.totalorder %s106, %s109
      %p118 = scmp.eq.s32.totalorder %s17, 3
      %p119 = por %p117, %p118
      %p120 = scmp.ne.s32.totalorder %s109, %s110
      %p121 = scmp.eq.s32.totalorder %s17, 0
      %p122 = por %p120, %p121
      %p123 = scmp.ne.s32.totalorder %s109, %s110
      %p124 = scmp.eq.s32.totalorder %s18, 3
      %p125 = por %p123, %p124
      %p127 = scmp.ne.s32.totalorder %s110, %s126
      %p128 = scmp.eq.s32.totalorder %s18, 0
      %p129 = por %p127, %p128
      %p130 = scmp.le.s32.totalorder 1, %s12
      %p131 = scmp.lt.s32.totalorder %s12, 5
      %p132 = pnand %p130, %p131
      %p133 = pneg %p132
      // Predicated region
      $region9: #{causal_conv1d.1} parent=5 // pred_check
        _
      $region10: #{causal_conv1d.1} parent=5 // pred_check_branch
        %135 = sbr.rel (%p132) target = $region12
      $region11: #{causal_conv1d.1} parent=5 // pred_region
        %s136 = ssub.s32 %s12, 1
        // Predicated region
        $region13: #{causal_conv1d.1} parent=11 // pred_check
          %p137 = pneg %p73
        $region14: #{causal_conv1d.1} parent=11 // pred_check_branch
          %139 = sbr.rel (%p137) target = $region16
        $region15: #{causal_conv1d.1} parent=11 // pred_region
          _
        $region16: #{causal_conv1d.1} parent=11 // pred_fallthru
          _
        // Predicated region
        $region17: #{causal_conv1d.1} parent=11 // pred_check
          %p140 = pneg %p94
        $region18: #{causal_conv1d.1} parent=11 // pred_check_branch
          %142 = sbr.rel (%p140) target = $region20
        $region19: #{causal_conv1d.1} parent=11 // pred_region
          _
        $region20: #{causal_conv1d.1} parent=11 // pred_fallthru
          _
      $region12: #{causal_conv1d.1} parent=5 // pred_fallthru
        _
      %p143 = scmp.lt.s32.totalorder %s12, 4
      // Predicated region
      $region21: #{causal_conv1d.1} parent=5 // pred_check
        %p144 = pneg %p143
      $region22: #{causal_conv1d.1} parent=5 // pred_check_branch
        %146 = sbr.rel (%p144) target = $region24
      $region23: #{causal_conv1d.1} parent=5 // pred_region
        // Predicated region
        $region25: #{causal_conv1d.1} parent=23 // pred_check
          %p147 = pneg %p46
        $region26: #{causal_conv1d.1} parent=23 // pred_check_branch
          %149 = sbr.rel (%p147) target = $region28
        $region27: #{causal_conv1d.1} parent=23 // pred_region
          %p150 = scmp.lt.s32.totalorder %s19, 1
          %s151 = scalar_select %p150, %s19, 1
          %p152 = scmp.lt.s32.totalorder %s20, 1
          %s153 = scalar_select %p152, %s20, 1
          %s154 = smul.addr %s151, 2
          %s155 = sadd.s32 %s153, %s154
          %s156 = smul.addr %s155, 4
          %s157 = scalar_lea.vmem %s0, %s156
        $region28: #{causal_conv1d.1} parent=23 // pred_fallthru
          _
      $region24: #{causal_conv1d.1} parent=5 // pred_fallthru
        _
      %p158 = scmp.le.s32.totalorder 1, %s12
      %p159 = scmp.lt.s32.totalorder %s12, 5
      %p160 = pnand %p158, %p159
      %p161 = pneg %p160
      // Predicated region
      $region29: #{causal_conv1d.1} parent=5 // pred_check
        _
      $region30: #{causal_conv1d.1} parent=5 // pred_check_branch
        %163 = sbr.rel (%p160) target = $region32
      $region31: #{causal_conv1d.1} parent=5 // pred_region
        %s164 = ssub.s32 %s12, 1
        %p165 = scmp.lt.s32.totalorder %s21, 1
        %s166 = scalar_select %p165, %s21, 1
        %p167 = scmp.lt.s32.totalorder %s22, 1
        %s168 = scalar_select %p167, %s22, 1
        %s169 = smul.addr %s166, 2
        %s170 = sadd.s32 %s168, %s169
        %s171 = smul.addr %s170, 4
        %s172 = scalar_lea.vmem %s0, %s171
        %p173 = pneg %p52
        %p174 = pneg %p49
        %p175 = pneg %p73
        %p176 = pneg %p70
        %p177 = pneg %p94
        %p178 = pneg %p91
        %p179 = pneg %p122
        %p180 = pneg %p119
        %s181 = sand.u32 %s109, 1
        %s182 = scalar_lea.sflag [#allocation4], %s181
        %s183 = sand.u32 %s109, 1
        %s184 = smul.addr %s183, 4
        %s185 = scalar_lea.vmem [#allocation3], %s184
        %p186 = scmp.lt.s32.totalorder %s21, 1
        %s187 = scalar_select %p186, %s21, 1
        %p188 = scmp.lt.s32.totalorder %s22, 1
        %s189 = scalar_select %p188, %s22, 1
        %s190 = smul.addr %s187, 2
        %s191 = sadd.s32 %s189, %s190
        %s192 = smul.addr %s191, 4
        %s193 = scalar_lea.vmem %s0, %s192
        %v194 = vld [vmem:[%s193] sm:$0xf]
        %p195 = scmp.eq.s32.totalorder %s22, 0
        // Predicated region
        $region33: #{causal_conv1d.1} parent=31 // pred_check
          %p196 = pneg %p195
        $region34: #{causal_conv1d.1} parent=31 // pred_check_branch
          %198 = sbr.rel (%p196) target = $region36
        $region35: #{causal_conv1d.1} parent=31 // pred_region
          %199 = vst [vmem:[#allocation2] sm:$0xf] 0.0
        $region36: #{causal_conv1d.1} parent=31 // pred_fallthru
          _
        %v200 = vld [vmem:[#allocation2] sm:$0xf]
        %v201 = vlaneseq
        %v202 = vand.u32 %v201, 127
        %vm203 = vcmp.lt.s32.totalorder %v202, 125
        %v204 = vsel %vm203, %v194, %v200
        %205 = vrot.lane.b32.xlu0 %v204, 3
        %v206 = vpop.permute.xlu0 %205
        %v207 = vld [vmem:[%s1] sm:$0xf]
        %209 = vset.pattern.permute.xlu0 0
        %210 = vperm.xlu0 %209, %v207
        %v211 = vpop.permute.xlu0 %210
        %v213 = vmul.f32 %v211, %v206
        %v214 = vadd.f32 %v213, 0.0
        %vm215 = vcmp.lt.s32.totalorder %v202, 126
        %v216 = vsel %vm215, %v194, %v200
        %217 = vrot.lane.b32.xlu0 %v216, 2
        %v218 = vpop.permute.xlu0 %217
        %s219 = scalar_lea.vmem %s1, 4
        %v220 = vld [vmem:[%s219] sm:$0xf]
        %222 = vset.pattern.permute.xlu0 0
        %223 = vperm.xlu0 %222, %v220
        %v224 = vpop.permute.xlu0 %223
        %v226 = vmul.f32 %v224, %v218
        %v227 = vadd.f32 %v214, %v226
        %vm228 = vcmp.lt.s32.totalorder %v202, 127
        %v229 = vsel %vm228, %v194, %v200
        %230 = vrot.lane.b32.xlu0 %v229, 1
        %v231 = vpop.permute.xlu0 %230
        %s232 = scalar_lea.vmem %s1, 8
        %v233 = vld [vmem:[%s232] sm:$0xf]
        %235 = vset.pattern.permute.xlu0 0
        %236 = vperm.xlu0 %235, %v233
        %v237 = vpop.permute.xlu0 %236
        %v239 = vmul.f32 %v237, %v231
        %v240 = vadd.f32 %v227, %v239
        %s241 = scalar_lea.vmem %s1, 12
        %v242 = vld [vmem:[%s241] sm:$0xf]
        %244 = vset.pattern.permute.xlu0 0
        %245 = vperm.xlu0 %244, %v242
        %v246 = vpop.permute.xlu0 %245
        %v248 = vmul.f32 %v246, %v194
        %v249 = vadd.f32 %v240, %v248
        %v250 = vld [vmem:[%s2] sm:$0xf]
        %252 = vset.pattern.permute.xlu0 0
        %253 = vperm.xlu0 %252, %v250
        %v254 = vpop.permute.xlu0 %253
        %v256 = vadd.f32 %v249, %v254
        %257 = vst [vmem:[%s185] sm:$0xf] %v256
        %258 = vst [vmem:[#allocation2] sm:$0xf] %v194
        %s259 = sand.u32 %s109, 1
        %s260 = scalar_lea.sflag [#allocation4], %s259
        %s261 = sand.u32 %s109, 1
        %s262 = smul.addr %s261, 4
        %s263 = scalar_lea.vmem [#allocation3], %s262
        // Predicated region
        $region37: #{causal_conv1d.1} parent=31 // pred_check
          %p264 = pneg %p119
        $region38: #{causal_conv1d.1} parent=31 // pred_check_branch
          %266 = sbr.rel (%p264) target = $region40
        $region39: #{causal_conv1d.1} parent=31 // pred_region
          %268 = vsyncadd %s260, 0
          %s269 = smul.addr %s21, 2
          %s270 = sadd.s32 %s22, %s269
          %s271 = smul.addr %s270, 4
          %s272 = scalar_lea.hbm %s3, %s271
          %s274 = sshll.u32 %s263, 4
          %s275 = int_to_ptr.vmem [resolvable:$true] %s274
          %s276 = sshll.u32 %s272, 4
          %s277 = int_to_ptr.hbm [resolvable:$true] %s276
          %279 = dma.vmem_to_hbm [thread:$0]  %s275, 64, %s277, %s260
        $region40: #{causal_conv1d.1} parent=31 // pred_fallthru
          _
      $region32: #{causal_conv1d.1} parent=5 // pred_fallthru
        _
      %p280 = scmp.le.s32.totalorder 2, %s12
      // Predicated region
      $region41: #{causal_conv1d.1} parent=5 // pred_check
        %p281 = pneg %p280
      $region42: #{causal_conv1d.1} parent=5 // pred_check_branch
        %283 = sbr.rel (%p281) target = $region44
      $region43: #{causal_conv1d.1} parent=5 // pred_region
        %s284 = ssub.s32 %s12, 2
        // Predicated region
        $region45: #{causal_conv1d.1} parent=43 // pred_check
          %p285 = pneg %p125
        $region46: #{causal_conv1d.1} parent=43 // pred_check_branch
          %287 = sbr.rel (%p285) target = $region48
        $region47: #{causal_conv1d.1} parent=43 // pred_region
          %s288 = sand.u32 %s110, 1
          %s289 = scalar_lea.sflag [#allocation4], %s288
          %s290 = sand.u32 %s110, 1
          %s291 = smul.addr %s290, 4
          %s292 = scalar_lea.vmem [#allocation3], %s291
          %294 = dma.done %s289, 64
        $region48: #{causal_conv1d.1} parent=43 // pred_fallthru
          _
      $region44: #{causal_conv1d.1} parent=5 // pred_fallthru
        _
    $region6: #{causal_conv1d.1} parent=1 // loop_footer
      %s16 = sadd.s32 1, %s12
    $region7: #{causal_conv1d.1} parent=1 // loop_footer_branch
      %11 = sbr.rel target = $region3
    $region8: #{causal_conv1d.1} parent=1 // loop_exit
      _
    %295 = vsyncpa [#allocation4], 1
    %s296 = scalar_lea.sflag [#allocation4], 1
    %297 = vsyncpa %s296, 1

</llo_original>
